<compile_context>
chip_gen: v5e
topology: v5e:2x2
jax: 0.10.0
libtpu: 0.0.40
codegen_flags: <defaults>
</compile_context>

<pallas_src>
import jax
import jax.numpy as jnp
from jax.experimental import pallas as pl
from jax.experimental.pallas import tpu as pltpu


def _l2norm_kernel(x_ref, o_ref):
    # x_ref block: (T_B, C, T_HW). Reduce over the channel axis (axis=1).
    x = x_ref[...].astype(jnp.float32)                   # f32 accumulation
    sq_sum = jnp.sum(x * x, axis=1, keepdims=True)       # (T_B, 1, T_HW), XLU reduce
    inv = jax.lax.rsqrt(sq_sum)                          # EUP rsqrt (separate slot)
    o_ref[...] = (x * inv).astype(o_ref.dtype)           # one VPU mul per element


def _largest_divisor_leq(n, cap):
    cap = max(1, min(n, cap))
    for d in range(cap, 0, -1):
        if n % d == 0:
            return d
    return 1


def l2norm(x, *, target_block_bytes=2 << 20, max_hw_tile=2048):
    """x: (B, C, H, W) float array -> same shape, L2-normalized over C."""
    B, C, H, W = x.shape
    HW = H * W
    itemsize = jnp.dtype(x.dtype).itemsize
    x3 = x.reshape(B, C, HW)

    # Lane tile: largest multiple of 128 that divides HW, capped at max_hw_tile.
    if HW % 128 == 0:
        t_hw = 128 * _largest_divisor_leq(HW // 128, max_hw_tile // 128)
    else:
        # TODO(synk): for HW not a multiple of 128 (tiny feature maps), fold or
        # pad to a lane-dense layout; fall back to full-extent blocks for now.
        t_hw = HW

    # Batch tile: amortize the ~0.35 us per-grid-step overhead when C*HW is
    # small, while keeping (in + out) * double-buffer well under scoped VMEM
    # (v7x default: 32 MiB). target_block_bytes=2 MiB -> ~8 MiB peak buffers.
    max_tb = max(1, target_block_bytes // (C * t_hw * itemsize))
    t_b = _largest_divisor_leq(B, max_tb)

    grid = (B // t_b, HW // t_hw)

    cost = pl.CostEstimate(
        flops=3 * B * C * HW,
        transcendentals=B * HW,
        bytes_accessed=2 * B * C * HW * itemsize,
    )

    out3 = pl.pallas_call(
        _l2norm_kernel,
        out_shape=jax.ShapeDtypeStruct((B, C, HW), x.dtype),
        grid_spec=pltpu.PrefetchScalarGridSpec(
            num_scalar_prefetch=0,
            grid=grid,
            in_specs=[pl.BlockSpec((t_b, C, t_hw), lambda b, s: (b, 0, s))],
            out_specs=pl.BlockSpec((t_b, C, t_hw), lambda b, s: (b, 0, s)),
        ),
        compiler_params=pltpu.CompilerParams(
            dimension_semantics=("parallel", "parallel"),
        ),
        cost_estimate=cost,
    )(x3)

    return out3.reshape(B, C, H, W)


if __name__ == "__main__":
    key = jax.random.PRNGKey(0)
    x = jax.random.normal(key, (2, 4, 16, 16), dtype=jnp.float32)

    y = l2norm(x)
    jax.block_until_ready(y)

    # Sanity check against a plain-JAX reference (matches torch.norm: no eps).
    ref = x / jnp.sqrt(jnp.sum(x * x, axis=1, keepdims=True))
    assert jnp.allclose(y, ref, atol=1e-5, rtol=1e-5)

    print("KERNEL_OK")
</pallas_src>

<mosaic_0001>
module attributes {stable_mosaic.version = 11 : i64} {
  func.func @_l2norm_kernel(%arg0: i32, %arg1: i32, %arg2: memref<2x4x256xf32, #tpu.memory_space<vmem>>, %arg3: memref<2x4x256xf32, #tpu.memory_space<vmem>>) attributes {dimension_semantics = [#tpu.dimension_semantics<parallel>, #tpu.dimension_semantics<parallel>], iteration_bounds = array<i64: 1, 1>, scalar_prefetch = 0 : i64, scratch_operands = 0 : i64, tpu.core_type = #tpu.core_type<tc>, window_params = [{transform_indices = @transform_0, window_bounds = array<i64: 2, 4, 256>}, {transform_indices = @transform_1, window_bounds = array<i64: 2, 4, 256>}]} {
    %c0 = arith.constant 0 : index
    %c0_0 = arith.constant 0 : index
    %c0_1 = arith.constant 0 : index
    %0 = vector.load %arg2[%c0, %c0_0, %c0_1] : memref<2x4x256xf32, #tpu.memory_space<vmem>>, vector<2x4x256xf32>
    %1 = arith.mulf %0, %0 : vector<2x4x256xf32>
    %cst = arith.constant dense<0.000000e+00> : vector<2x256xf32>
    %2 = vector.multi_reduction <add>, %1, %cst [1] : vector<2x4x256xf32> to vector<2x256xf32>
    %3 = vector.shape_cast %2 : vector<2x256xf32> to vector<2x1x256xf32>
    %4 = math.rsqrt %3 : vector<2x1x256xf32>
    %5 = vector.broadcast %4 : vector<2x1x256xf32> to vector<2x4x256xf32>
    %6 = arith.mulf %0, %5 : vector<2x4x256xf32>
    %c0_2 = arith.constant 0 : index
    %c0_3 = arith.constant 0 : index
    %c0_4 = arith.constant 0 : index
    %7 = vector.load %arg3[%c0_2, %c0_3, %c0_4] : memref<2x4x256xf32, #tpu.memory_space<vmem>>, vector<2x4x256xf32>
    tpu.vector_store %arg3[%c0_2, %c0_3, %c0_4], %6 {strides = array<i32>} : memref<2x4x256xf32, #tpu.memory_space<vmem>>, vector<2x4x256xf32>,
    return
  }
  func.func @transform_0(%arg0: i32, %arg1: i32) -> (i32, i32, i32) {
    %c0_i32 = arith.constant 0 : i32
    %c0_i32_0 = arith.constant 0 : i32
    return %arg0, %c0_i32, %arg1 : i32, i32, i32
  }
  func.func @transform_1(%arg0: i32, %arg1: i32) -> (i32, i32, i32) {
    %c0_i32 = arith.constant 0 : i32
    %c0_i32_0 = arith.constant 0 : i32
    return %arg0, %c0_i32, %arg1 : i32, i32, i32
  }
}

</mosaic_0001>

<llo_original>
// kernel: tpu_custom_call.1
$region0: #{tpu_custom_call.1}
  #allocation0 [shape = 'u32[]', space=smem, size = 0x4, offset = 0x4, fixed_abs, tag = 'smem constant byte address 0x4 - core index']
  #allocation1 [shape = 'u32[72,128]{1,0:T(1,128)}', space=vmem, size = 0x9000, scoped, tag = 'internal scratch']
  %s0 = inlined_call_operand.hbm [shape: f32[2,4,256], index: 0, kind: input, shape index: {}]
  %s1 = inlined_call_operand.hbm [shape: f32[2,4,256], index: 1, kind: output, shape index: {}]
  %s2 = sld [smem:[#allocation0]]
  $region18: #{tpu_custom_call.1} parent=0
    _
  %s4 = ssub.s32 1, %s2
  %s5 = scalar_select 0, %s4, %s2
  $region1: #{tpu_custom_call.1} parent=0
    #allocation2 [shape = 'u8[8192]{0}', space=vmem, size = 0x2000, scoped, tag = 'input window, operand 0, single buffered']
    #allocation3 [shape = 's32[1]{0}', space=sflag, size = 0x4, scoped, tag = 'scoped memory for tpu_custom_call.1']
    #allocation4 [shape = 's32[1]{0}', space=sflag, size = 0x4, scoped, tag = 'scoped memory for tpu_custom_call.1']
    #allocation5 [shape = 'u8[8192]{0}', space=vmem, size = 0x2000, scoped, tag = 'output window, operand 0, single buffered']
    %6 = vsyncpa [#allocation3], 0
    %7 = vsyncpa [#allocation4], 0
    // Predicated region
    $region2: #{tpu_custom_call.1} parent=1 // pred_check
      _
    $region3: #{tpu_custom_call.1} parent=1 // pred_check_branch
      %9 = sbr.rel (0) target = $region5
    $region4: #{tpu_custom_call.1} parent=1 // pred_region
      %11 = vsyncadd [#allocation3], 0
      %s12 = sshll.u32 %s0, 4
      %s13 = int_to_ptr.hbm [resolvable:$true] %s12
      %s14 = sshll.u32 [#allocation2], 4
      %s15 = int_to_ptr.vmem [resolvable:$true] %s14
      %20 = dma.hbm_to_vmem [thread:$0]  %s13, 256, %s15, [#allocation3], 128, 128, 8
    $region5: #{tpu_custom_call.1} parent=1 // pred_fallthru
      _
    // Predicated region
    $region6: #{tpu_custom_call.1} parent=1 // pred_check
      _
    $region7: #{tpu_custom_call.1} parent=1 // pred_check_branch
      %22 = sbr.rel (0) target = $region9
    $region8: #{tpu_custom_call.1} parent=1 // pred_region
      %24 = dma.done [#allocation3], 256
    $region9: #{tpu_custom_call.1} parent=1 // pred_fallthru
      _
    %v25 = vld [vmem:[#allocation2] sm:$0xff]
    %v26 = vld [vmem:[#allocation2 + $0x8] sm:$0xff]
    %v27 = vmul.f32 %v25, %v25
    %v28 = vmul.f32 %v26, %v26
    %31 = vst [vmem:[#allocation1] ss:$2 sm:$0xff] %v27
    %v32 = vld.sshfl [vmem:[#allocation1] sm:$0xff pattern:$0x75316420]
    %v33 = vld.sshfl [vmem:[#allocation1 + $0x8] sm:$0xff pattern:$0x75316420]
    %s34 = scalar_lea.vmem [#allocation1], 16
    %35 = vst [vmem:[%s34] ss:$2 sm:$0xff] %v28
    %v36 = vld.sshfl [vmem:[#allocation1 + $0x10] sm:$0xff pattern:$0x75316420]
    %v37 = vld.sshfl [vmem:[#allocation1 + $0x18] sm:$0xff pattern:$0x75316420]
    %vm42 = vcmask 1043456
    %v43 = vsel %vm42, %v32, 0.0
    %v44 = vrot.slane %v43, 4
    %v45 = vadd.f32 %v43, %v44
    %v46 = vrot.slane %v45, 2
    %v47 = vadd.f32 %v45, %v46
    %v48 = vrot.slane %v47, 1
    %v49 = vadd.f32 %v47, %v48
    %v50 = vsel %vm42, %v33, 0.0
    %v51 = vrot.slane %v50, 4
    %v52 = vadd.f32 %v50, %v51
    %v53 = vrot.slane %v52, 2
    %v54 = vadd.f32 %v52, %v53
    %v55 = vrot.slane %v54, 1
    %v56 = vadd.f32 %v54, %v55
    %v57 = vsel %vm42, %v36, 0.0
    %v58 = vrot.slane %v57, 4
    %v59 = vadd.f32 %v57, %v58
    %v60 = vrot.slane %v59, 2
    %v61 = vadd.f32 %v59, %v60
    %v62 = vrot.slane %v61, 1
    %v63 = vadd.f32 %v61, %v62
    %v64 = vsel %vm42, %v37, 0.0
    %v65 = vrot.slane %v64, 4
    %v66 = vadd.f32 %v64, %v65
    %v67 = vrot.slane %v66, 2
    %v68 = vadd.f32 %v66, %v67
    %v69 = vrot.slane %v68, 1
    %v70 = vadd.f32 %v68, %v69
    %v71 = vrsqrt.pop %v49
    %v72 = vmul.f32 %v71, %v49
    %v73 = vmul.f32 %v72, %v71
    %v74 = vmul.f32 0.5, %v73
    %v75 = vsub.f32 1.5, %v74
    %v76 = vmul.f32 %v71, %v75
    %vm77 = vweird.f32 %v49
    %vm78 = vweird.f32 %v71
    %vm79 = vmor %vm77, %vm78
    %v80 = vsel %vm79, %v71, %v76
    %v81 = vrsqrt.pop %v56
    %v82 = vmul.f32 %v81, %v56
    %v83 = vmul.f32 %v82, %v81
    %v84 = vmul.f32 0.5, %v83
    %v85 = vsub.f32 1.5, %v84
    %v86 = vmul.f32 %v81, %v85
    %vm87 = vweird.f32 %v56
    %vm88 = vweird.f32 %v81
    %vm89 = vmor %vm87, %vm88
    %v90 = vsel %vm89, %v81, %v86
    %v91 = vrsqrt.pop %v63
    %v92 = vmul.f32 %v91, %v63
    %v93 = vmul.f32 %v92, %v91
    %v94 = vmul.f32 0.5, %v93
    %v95 = vsub.f32 1.5, %v94
    %v96 = vmul.f32 %v91, %v95
    %vm97 = vweird.f32 %v63
    %vm98 = vweird.f32 %v91
    %vm99 = vmor %vm97, %vm98
    %v100 = vsel %vm99, %v91, %v96
    %v101 = vrsqrt.pop %v70
    %v102 = vmul.f32 %v101, %v70
    %v103 = vmul.f32 %v102, %v101
    %v104 = vmul.f32 0.5, %v103
    %v105 = vsub.f32 1.5, %v104
    %v106 = vmul.f32 %v101, %v105
    %vm107 = vweird.f32 %v70
    %vm108 = vweird.f32 %v101
    %vm109 = vmor %vm107, %vm108
    %v110 = vsel %vm109, %v101, %v106
    %v115 = vrot.slane %v90, 4
    %v116 = vrot.slane %v110, 4
    %v117 = vsel %vm42, %v80, %v115
    %v118 = vsel %vm42, %v100, %v116
    %v121 = vmul.f32 %v25, %v117
    %v122 = vmul.f32 %v26, %v118
    %123 = vst [vmem:[#allocation5] sm:$0xff] %v121
    %124 = vst [vmem:[#allocation5 + $0x8] sm:$0xff] %v122
    // Predicated region
    $region10: #{tpu_custom_call.1} parent=1 // pred_check
      _
    $region11: #{tpu_custom_call.1} parent=1 // pred_check_branch
      %126 = sbr.rel (0) target = $region13
    $region12: #{tpu_custom_call.1} parent=1 // pred_region
      %128 = vsyncadd [#allocation4], 0
      %s129 = sshll.u32 [#allocation5], 4
      %s130 = int_to_ptr.vmem [resolvable:$true] %s129
      %s131 = sshll.u32 %s1, 4
      %s132 = int_to_ptr.hbm [resolvable:$true] %s131
      %137 = dma.vmem_to_hbm [thread:$0]  %s130, 256, %s132, [#allocation4], 128, 128, 8
    $region13: #{tpu_custom_call.1} parent=1 // pred_fallthru
      _
    // Predicated region
    $region14: #{tpu_custom_call.1} parent=1 // pred_check
      _
    $region15: #{tpu_custom_call.1} parent=1 // pred_check_branch
      %139 = sbr.rel (0) target = $region17
    $region16: #{tpu_custom_call.1} parent=1 // pred_region
      %141 = dma.done [#allocation4], 256
    $region17: #{tpu_custom_call.1} parent=1 // pred_fallthru
      _
    %142 = vsyncpa [#allocation3], 1
    %143 = vsyncpa [#allocation4], 1

</llo_original>
